<compile_context>
chip_gen: v6e
topology: v6e:2x2x1
jax: 0.10.0
libtpu: 0.0.40
codegen_flags: <defaults>
</compile_context>

<pallas_src>
import functools

import jax
import jax.numpy as jnp
from jax.experimental import pallas as pl
from jax.experimental.pallas import tpu as pltpu


def _round_up(x, m):
    return ((x + m - 1) // m) * m


def _vote_ensemble_kernel(x_ref, w_ref, b_ref, o_ref, acc_ref, *, num_nets,
                          num_classes):
    # Grid: (batch tiles, D-reduction tiles); the reduction axis is last.
    # x_ref:   (TB, TK)    batch tile x D tile of flattened inputs
    # w_ref:   (TK, NKp)   D tile of all ensemble weights, folded+padded lanes
    # b_ref:   (1, NKp)    all biases (f32, zero in pad lanes)
    # o_ref:   (TB, NKp)   softmax probabilities (lane-dense store)
    # acc_ref: (TB, NKp)   f32 logit accumulator (VMEM scratch)
    k = pl.program_id(1)

    @pl.when(k == 0)
    def _init():
        acc_ref[...] = jnp.zeros_like(acc_ref)

    w = w_ref[...]
    x = x_ref[...].astype(w.dtype)      # fallback cast on the (small) x tile
    acc_ref[...] += jnp.dot(x, w, preferred_element_type=jnp.float32)

    @pl.when(k == pl.num_programs(1) - 1)
    def _finalize():
        logits = acc_ref[...] + b_ref[...]
        tb, nkp = logits.shape
        lane = jax.lax.broadcasted_iota(jnp.int32, (tb, nkp), 1)
        neg = jnp.float32(-1e30)

        # Segmented (per-net), numerically-stable softmax along the lane axis
        # using lane masks (no minor-dim reshape in-kernel).  num_nets is a
        # small static Python int so this unrolled loop stays tiny.  Pad lanes
        # (>= N*K) are outside every mask, so their output is exactly 0.
        # Normalization uses an EXACT reciprocal so each net's probabilities
        # sum to 1 to f32 rounding (approx=True broke this guarantee).
        # TODO(synk): for large ensembles, share a single full-row exp via a
        # per-lane segment-max map instead of N masked exps (EUP/XLU pressure).
        probs = jnp.zeros_like(logits)
        for n in range(num_nets):
            mask = (lane >= n * num_classes) & (lane < (n + 1) * num_classes)
            seg = jnp.where(mask, logits, neg)
            m = jnp.max(seg, axis=-1, keepdims=True)
            e = jnp.exp(seg - m)                        # masked/pad lanes -> 0
            denom = jnp.sum(e, axis=-1, keepdims=True)
            probs = probs + e * (jnp.float32(1.0) / denom)
        o_ref[...] = probs.astype(o_ref.dtype)


def pack_vote_ensemble_params(weights, biases):
    """One-time packing (model-build time) -- NOT paid on every forward call.

    weights: [N, D, K] -> [D, NKp]  (ensemble axis folded into lanes, lane dim
                                     zero-padded up to a multiple of 128)
    biases:  [N, K]    -> [1, NKp]  (f32, zero in pad lanes)
    """
    n_nets, d, k = weights.shape
    nk = n_nets * k
    nkp = _round_up(nk, 128)
    w_all = jnp.transpose(weights, (1, 0, 2)).reshape(d, nk)
    w_all = jnp.pad(w_all, ((0, 0), (0, nkp - nk)))
    b_all = jnp.pad(biases.reshape(1, nk).astype(jnp.float32),
                    ((0, 0), (0, nkp - nk)))
    return w_all, b_all


def _vmem_limit_bytes():
    # Generation-aware VMEM budget: ~80% of physical (v5e/v6e 128 MiB parts ->
    # ~102 MiB; v7x 64 MiB -> ~51 MiB), capped at 112 MiB.
    try:
        cap = int(pltpu.get_tpu_info().vmem_capacity_bytes)
    except Exception:  # non-TPU backend / interpret-mode fallback
        cap = 64 * 1024 * 1024
    return int(min(cap * 0.8, 112 * 1024 * 1024))


def _choose_d_tile(d, d_tile):
    if d <= d_tile:
        return d
    for tk in range(d_tile, 127, -128):
        if tk % 128 == 0 and d % tk == 0:
            return tk
    # TODO(synk): pad D (zero weight rows) so ragged reduction tiles never read
    # uninitialized x lanes; until then fall back to a single D pass.
    return d


def _choose_batch_tile(b, batch_tile, tk, nkp, x_itemsize, w_itemsize,
                       vmem_budget):
    if b > batch_tile:
        tb = batch_tile
    elif b >= 512:
        # v7x: ensure >= 2 batch grid steps so the "parallel" axis lands work
        # on both TensorCores; keep tiles a multiple of 256 (full MXU M pass).
        tb = _round_up(pl.cdiv(b, 2), 256)
    else:
        tb = b                # tiny batch: block == full dim (allowed)

    def footprint(tb_):
        return (2 * tb_ * tk * x_itemsize      # x tile (double buffered)
                + 2 * tk * nkp * w_itemsize    # weight tile (double buffered)
                + 2 * tb_ * nkp * 4            # output tile (double buffered)
                + tb_ * nkp * 4                # f32 accumulator scratch
                + nkp * 4)                     # bias

    while tb % 256 == 0 and tb > 256 and footprint(tb) > vmem_budget:
        tb -= 256
    return tb


def vote_ensemble(x_nchw, w_packed, b_packed, *, num_nets, num_classes,
                  batch_tile=512, d_tile=2048):
    """VoteEnsemble forward: per-net softmax(flatten(x) @ W_i + b_i).

    x_nchw:   [B, C, H, W]   (bf16 recommended: x is the dominant HBM stream)
    w_packed: [D, NKp]       from pack_vote_ensemble_params (bf16 recommended)
    b_packed: [1, NKp]       from pack_vote_ensemble_params (f32)
    returns:  [N, B, K] softmax probabilities (float32)
    """
    b = x_nchw.shape[0]
    d = 1
    for s in x_nchw.shape[1:]:
        d *= int(s)
    nk = num_nets * num_classes
    d_w, nkp = w_packed.shape
    assert d_w == d, (d_w, d)
    assert nkp % 128 == 0 and nkp >= nk, (nkp, nk)
    assert b_packed.shape == (1, nkp), b_packed.shape

    # Layout plumbing only; no dtype cast here (a wrapper astype would be an
    # extra full HBM pass over x).
    x_flat = x_nchw.reshape(b, d)

    tk = _choose_d_tile(d, d_tile)
    vmem_limit = _vmem_limit_bytes()
    tb = _choose_batch_tile(b, batch_tile, tk, nkp,
                            x_flat.dtype.itemsize, w_packed.dtype.itemsize,
                            int(vmem_limit * 0.75))

    grid = (pl.cdiv(b, tb), pl.cdiv(d, tk))

    cost = pl.CostEstimate(
        flops=int(2 * b * d * nkp),
        transcendentals=int(b * nkp * num_nets),
        bytes_accessed=int(x_flat.size * x_flat.dtype.itemsize
                           + w_packed.size * w_packed.dtype.itemsize
                           + b_packed.size * 4
                           + b * nkp * 4),
    )

    kernel = functools.partial(_vote_ensemble_kernel, num_nets=num_nets,
                               num_classes=num_classes)
    out = pl.pallas_call(
        kernel,
        out_shape=jax.ShapeDtypeStruct((b, nkp), jnp.float32),
        grid_spec=pltpu.PrefetchScalarGridSpec(
            num_scalar_prefetch=0,
            grid=grid,
            in_specs=[
                pl.BlockSpec((tb, tk), lambda i, k: (i, k)),     # x tile
                pl.BlockSpec((tk, nkp), lambda i, k: (k, 0)),    # weight D-slab
                # Bias is grid-invariant and tiny (nkp*4 bytes); single
                # buffering it would save almost nothing, so keep defaults.
                pl.BlockSpec((1, nkp), lambda i, k: (0, 0)),     # all biases
            ],
            out_specs=pl.BlockSpec((tb, nkp), lambda i, k: (i, 0)),
            scratch_shapes=[pltpu.VMEM((tb, nkp), jnp.float32)],
        ),
        compiler_params=pltpu.CompilerParams(
            dimension_semantics=("parallel", "arbitrary"),
            vmem_limit_bytes=vmem_limit,
        ),
        cost_estimate=cost,
    )(x_flat, w_packed, b_packed)

    # Layout plumbing (outside the kernel): drop pad lanes, (B, N*K)->(N, B, K).
    return jnp.transpose(out[:, :nk].reshape(b, num_nets, num_classes),
                         (1, 0, 2))


def vote_ensemble_ref(x_nchw, weights, biases):
    """Pure-JAX reference (matches the kernel's bf16-weight numerics)."""
    b = x_nchw.shape[0]
    n_nets, d, k = weights.shape
    xf = x_nchw.reshape(b, d).astype(weights.dtype).astype(jnp.float32)
    wf = weights.astype(jnp.float32)
    logits = jnp.einsum("bd,ndk->nbk", xf, wf) + biases.astype(jnp.float32)[:, None, :]
    return jax.nn.softmax(logits, axis=-1)


if __name__ == "__main__":
    # Small deterministic setup: 3 ensemble members, NCHW input [2, 4, 16, 16],
    # each net a linear classifier over the flattened input -> 10 classes.
    key = jax.random.PRNGKey(0)
    kx, kw, kb = jax.random.split(key, 3)

    B, C, H, W = 2, 4, 16, 16
    N_NETS, K = 3, 10
    D = C * H * W

    # x delivered in bf16: it is the dominant HBM stream for this mem-bound
    # kernel (the in-kernel astype handles any dtype as a fallback).
    x = jax.random.normal(kx, (B, C, H, W), dtype=jnp.float32).astype(jnp.bfloat16)
    weights = (0.05 * jax.random.normal(kw, (N_NETS, D, K), dtype=jnp.float32)
               ).astype(jnp.bfloat16)
    biases = 0.1 * jax.random.normal(kb, (N_NETS, K), dtype=jnp.float32)

    # One-time pre-pack (model-build time), not paid per forward call.
    w_packed, b_packed = pack_vote_ensemble_params(weights, biases)

    # d_tile=512 -> two reduction steps at D=1024, exercising the accumulator.
    out = jax.block_until_ready(
        vote_ensemble(x, w_packed, b_packed, num_nets=N_NETS, num_classes=K,
                      d_tile=512))
    ref = vote_ensemble_ref(x, weights, biases)

    assert out.shape == (N_NETS, B, K), out.shape
    err = float(jnp.max(jnp.abs(out - ref)))
    assert jnp.allclose(out, ref, atol=2e-3, rtol=0.0), f"mismatch vs reference: {err}"
    # Exact (non-approximate) normalization: rows sum to 1 to f32 rounding.
    assert jnp.allclose(jnp.sum(out, axis=-1), 1.0, atol=1e-4)

    print("KERNEL_OK")
</pallas_src>

<mosaic_0001>
module attributes {stable_mosaic.version = 11 : i64} {
  func.func @_vote_ensemble_kernel(%arg0: i32, %arg1: i32, %arg2: memref<2x512xbf16, #tpu.memory_space<vmem>>, %arg3: memref<512x128xbf16, #tpu.memory_space<vmem>>, %arg4: memref<1x128xf32, #tpu.memory_space<vmem>>, %arg5: memref<2x128xf32, #tpu.memory_space<vmem>>, %arg6: memref<2x128xf32, #tpu.memory_space<vmem>>) attributes {dimension_semantics = [#tpu.dimension_semantics<parallel>, #tpu.dimension_semantics<arbitrary>], iteration_bounds = array<i64: 1, 2>, scalar_prefetch = 0 : i64, scratch_operands = 1 : i64, tpu.core_type = #tpu.core_type<tc>, window_params = [{transform_indices = @transform_0, window_bounds = array<i64: 2, 512>}, {transform_indices = @transform_1, window_bounds = array<i64: 512, 128>}, {pipeline_mode = #tpu.pipeline_mode<synchronous>, transform_indices = @transform_2, window_bounds = array<i64: 1, 128>}, {transform_indices = @transform_3, window_bounds = array<i64: 2, 128>}]} {
    %c0_i32 = arith.constant 0 : i32
    %0 = arith.cmpi eq, %arg1, %c0_i32 : i32
    %1 = arith.extui %0 : i1 to i32
    %c0_i32_0 = arith.constant 0 : i32
    %2 = arith.cmpi ne, %1, %c0_i32_0 : i32
    scf.if %2 {
      %cst_9 = arith.constant 0.000000e+00 : f32
      %12 = vector.broadcast %cst_9 : f32 to vector<2x128xf32>
      %c0_10 = arith.constant 0 : index
      %c0_11 = arith.constant 0 : index
      %13 = vector.load %arg6[%c0_10, %c0_11] : memref<2x128xf32, #tpu.memory_space<vmem>>, vector<2x128xf32>
      tpu.vector_store %arg6[%c0_10, %c0_11], %12 {strides = array<i32>} : memref<2x128xf32, #tpu.memory_space<vmem>>, vector<2x128xf32>,
    } else {
    }
    %c0 = arith.constant 0 : index
    %c0_1 = arith.constant 0 : index
    %3 = vector.load %arg3[%c0, %c0_1] : memref<512x128xbf16, #tpu.memory_space<vmem>>, vector<512x128xbf16>
    %c0_2 = arith.constant 0 : index
    %c0_3 = arith.constant 0 : index
    %4 = vector.load %arg2[%c0_2, %c0_3] : memref<2x512xbf16, #tpu.memory_space<vmem>>, vector<2x512xbf16>
    %c0_4 = arith.constant 0 : index
    %c0_5 = arith.constant 0 : index
    %5 = vector.load %arg6[%c0_4, %c0_5] : memref<2x128xf32, #tpu.memory_space<vmem>>, vector<2x128xf32>
    %cst = arith.constant dense<0.000000e+00> : vector<2x128xf32>
    %6 = tpu.matmul %4, %3, %cst {dimension_numbers = #tpu.dot_dimension_numbers<[1], [0], [0], [1], [0, 0, 1, 1], [], []>} : vector<2x512xbf16>, vector<512x128xbf16>, vector<2x128xf32> -> vector<2x128xf32>
    %7 = arith.addf %5, %6 : vector<2x128xf32>
    %c0_6 = arith.constant 0 : index
    %c0_7 = arith.constant 0 : index
    %8 = vector.load %arg6[%c0_6, %c0_7] : memref<2x128xf32, #tpu.memory_space<vmem>>, vector<2x128xf32>
    tpu.vector_store %arg6[%c0_6, %c0_7], %7 {strides = array<i32>} : memref<2x128xf32, #tpu.memory_space<vmem>>, vector<2x128xf32>,
    %c1_i32 = arith.constant 1 : i32
    %9 = arith.cmpi eq, %arg1, %c1_i32 : i32
    %10 = arith.extui %9 : i1 to i32
    %c0_i32_8 = arith.constant 0 : i32
    %11 = arith.cmpi ne, %10, %c0_i32_8 : i32
    scf.if %11 {
      %c0_9 = arith.constant 0 : index
      %c0_10 = arith.constant 0 : index
      %12 = vector.load %arg6[%c0_9, %c0_10] : memref<2x128xf32, #tpu.memory_space<vmem>>, vector<2x128xf32>
      %c0_11 = arith.constant 0 : index
      %c0_12 = arith.constant 0 : index
      %13 = vector.load %arg4[%c0_11, %c0_12] : memref<1x128xf32, #tpu.memory_space<vmem>>, vector<1x128xf32>
      %14 = vector.broadcast %13 : vector<1x128xf32> to vector<2x128xf32>
      %15 = arith.addf %12, %14 : vector<2x128xf32>
      %16 = tpu.iota {dimensions = array<i32: 1>} : vector<2x128xi32>
      %cst_13 = arith.constant 0.000000e+00 : f32
      %17 = vector.broadcast %cst_13 : f32 to vector<2x128xf32>
      %c0_i32_14 = arith.constant 0 : i32
      %18 = vector.broadcast %c0_i32_14 : i32 to vector<2x128xi32>
      %19 = arith.cmpi sge, %16, %18 : vector<2x128xi32>
      %c10_i32 = arith.constant 10 : i32
      %20 = vector.broadcast %c10_i32 : i32 to vector<2x128xi32>
      %21 = arith.cmpi slt, %16, %20 : vector<2x128xi32>
      %22 = arith.andi %19, %21 : vector<2x128xi1>
      %cst_15 = arith.constant -1.000000e+30 : f32
      %23 = vector.broadcast %cst_15 : f32 to vector<2x128xf32>
      %24 = arith.select %22, %15, %23 : vector<2x128xi1>, vector<2x128xf32>
      %cst_16 = arith.constant dense<0xFF800000> : vector<2xf32>
      %25 = vector.multi_reduction <maximumf>, %24, %cst_16 [1] : vector<2x128xf32> to vector<2xf32>
      %26 = vector.shape_cast %25 : vector<2xf32> to vector<2x1xf32>
      %27 = vector.broadcast %26 : vector<2x1xf32> to vector<2x128xf32>
      %28 = arith.subf %24, %27 : vector<2x128xf32>
      %29 = math.exp %28 : vector<2x128xf32>
      %cst_17 = arith.constant dense<0.000000e+00> : vector<2xf32>
      %30 = vector.multi_reduction <add>, %29, %cst_17 [1] : vector<2x128xf32> to vector<2xf32>
      %31 = vector.shape_cast %30 : vector<2xf32> to vector<2x1xf32>
      %cst_18 = arith.constant 1.000000e+00 : f32
      %32 = vector.broadcast %cst_18 : f32 to vector<2x1xf32>
      %33 = arith.divf %32, %31 : vector<2x1xf32>
      %34 = vector.broadcast %33 : vector<2x1xf32> to vector<2x128xf32>
      %35 = arith.mulf %29, %34 : vector<2x128xf32>
      %36 = arith.addf %17, %35 : vector<2x128xf32>
      %c10_i32_19 = arith.constant 10 : i32
      %37 = vector.broadcast %c10_i32_19 : i32 to vector<2x128xi32>
      %38 = arith.cmpi sge, %16, %37 : vector<2x128xi32>
      %c20_i32 = arith.constant 20 : i32
      %39 = vector.broadcast %c20_i32 : i32 to vector<2x128xi32>
      %40 = arith.cmpi slt, %16, %39 : vector<2x128xi32>
      %41 = arith.andi %38, %40 : vector<2x128xi1>
      %cst_20 = arith.constant -1.000000e+30 : f32
      %42 = vector.broadcast %cst_20 : f32 to vector<2x128xf32>
      %43 = arith.select %41, %15, %42 : vector<2x128xi1>, vector<2x128xf32>
      %cst_21 = arith.constant dense<0xFF800000> : vector<2xf32>
      %44 = vector.multi_reduction <maximumf>, %43, %cst_21 [1] : vector<2x128xf32> to vector<2xf32>
      %45 = vector.shape_cast %44 : vector<2xf32> to vector<2x1xf32>
      %46 = vector.broadcast %45 : vector<2x1xf32> to vector<2x128xf32>
      %47 = arith.subf %43, %46 : vector<2x128xf32>
      %48 = math.exp %47 : vector<2x128xf32>
      %cst_22 = arith.constant dense<0.000000e+00> : vector<2xf32>
      %49 = vector.multi_reduction <add>, %48, %cst_22 [1] : vector<2x128xf32> to vector<2xf32>
      %50 = vector.shape_cast %49 : vector<2xf32> to vector<2x1xf32>
      %cst_23 = arith.constant 1.000000e+00 : f32
      %51 = vector.broadcast %cst_23 : f32 to vector<2x1xf32>
      %52 = arith.divf %51, %50 : vector<2x1xf32>
      %53 = vector.broadcast %52 : vector<2x1xf32> to vector<2x128xf32>
      %54 = arith.mulf %48, %53 : vector<2x128xf32>
      %55 = arith.addf %36, %54 : vector<2x128xf32>
      %c20_i32_24 = arith.constant 20 : i32
      %56 = vector.broadcast %c20_i32_24 : i32 to vector<2x128xi32>
      %57 = arith.cmpi sge, %16, %56 : vector<2x128xi32>
      %c30_i32 = arith.constant 30 : i32
      %58 = vector.broadcast %c30_i32 : i32 to vector<2x128xi32>
      %59 = arith.cmpi slt, %16, %58 : vector<2x128xi32>
      %60 = arith.andi %57, %59 : vector<2x128xi1>
      %cst_25 = arith.constant -1.000000e+30 : f32
      %61 = vector.broadcast %cst_25 : f32 to vector<2x128xf32>
      %62 = arith.select %60, %15, %61 : vector<2x128xi1>, vector<2x128xf32>
      %cst_26 = arith.constant dense<0xFF800000> : vector<2xf32>
      %63 = vector.multi_reduction <maximumf>, %62, %cst_26 [1] : vector<2x128xf32> to vector<2xf32>
      %64 = vector.shape_cast %63 : vector<2xf32> to vector<2x1xf32>
      %65 = vector.broadcast %64 : vector<2x1xf32> to vector<2x128xf32>
      %66 = arith.subf %62, %65 : vector<2x128xf32>
      %67 = math.exp %66 : vector<2x128xf32>
      %cst_27 = arith.constant dense<0.000000e+00> : vector<2xf32>
      %68 = vector.multi_reduction <add>, %67, %cst_27 [1] : vector<2x128xf32> to vector<2xf32>
      %69 = vector.shape_cast %68 : vector<2xf32> to vector<2x1xf32>
      %cst_28 = arith.constant 1.000000e+00 : f32
      %70 = vector.broadcast %cst_28 : f32 to vector<2x1xf32>
      %71 = arith.divf %70, %69 : vector<2x1xf32>
      %72 = vector.broadcast %71 : vector<2x1xf32> to vector<2x128xf32>
      %73 = arith.mulf %67, %72 : vector<2x128xf32>
      %74 = arith.addf %55, %73 : vector<2x128xf32>
      %c0_29 = arith.constant 0 : index
      %c0_30 = arith.constant 0 : index
      %75 = vector.load %arg5[%c0_29, %c0_30] : memref<2x128xf32, #tpu.memory_space<vmem>>, vector<2x128xf32>
      tpu.vector_store %arg5[%c0_29, %c0_30], %74 {strides = array<i32>} : memref<2x128xf32, #tpu.memory_space<vmem>>, vector<2x128xf32>,
    } else {
    }
    return
  }
  func.func @transform_0(%arg0: i32, %arg1: i32) -> (i32, i32) {
    %c0_i32 = arith.constant 0 : i32
    return %arg0, %arg1 : i32, i32
  }
  func.func @transform_1(%arg0: i32, %arg1: i32) -> (i32, i32) {
    %c0_i32 = arith.constant 0 : i32
    %c0_i32_0 = arith.constant 0 : i32
    return %arg1, %c0_i32 : i32, i32
  }
  func.func @transform_2(%arg0: i32, %arg1: i32) -> (i32, i32) {
    %c0_i32 = arith.constant 0 : i32
    %c0_i32_0 = arith.constant 0 : i32
    %c0_i32_1 = arith.constant 0 : i32
    return %c0_i32, %c0_i32_0 : i32, i32
  }
  func.func @transform_3(%arg0: i32, %arg1: i32) -> (i32, i32) {
    %c0_i32 = arith.constant 0 : i32
    %c0_i32_0 = arith.constant 0 : i32
    return %arg0, %c0_i32 : i32, i32
  }
}

</mosaic_0001>

<llo_original>
// kernel: tpu_custom_call.1
$region0: #{tpu_custom_call.1}
  #allocation0 [shape = 'u32[]', space=smem, size = 0x4, offset = 0x4, fixed_abs, tag = 'smem constant byte address 0x4 - core index']
  #allocation1 [shape = 'u32[144,128]{1,0:T(1,128)}', space=vmem, size = 0x12000, scoped, tag = 'internal scratch']
  #allocation2 [shape = 'f32[2,128]{1,0:T(2,128)}', space=vmem, size = 0x400, scoped, tag = 'scratch operand']
  %s0 = inlined_call_operand.hbm [shape: bf16[2,1024], index: 0, kind: input, shape index: {}]
  %s1 = inlined_call_operand.hbm [shape: bf16[1024,128], index: 1, kind: input, shape index: {}]
  %s2 = inlined_call_operand.vmem [shape: f32[1,128], index: 2, kind: input, shape index: {}]
  %s3 = inlined_call_operand.hbm [shape: f32[2,128], index: 3, kind: output, shape index: {}]
  %s4 = sld [smem:[#allocation0]]
  $region61: #{tpu_custom_call.1} parent=0
    _
  %s6 = ssub.s32 1, %s4
  %s7 = scalar_select 0, %s6, %s4
  $region1: #{tpu_custom_call.1} parent=0
    #allocation3 [shape = 'u8[4096]{0}', space=vmem, size = 0x1000, scoped, tag = 'input window, operand 0']
    #allocation4 [shape = 's32[2]{0}', space=sflag, size = 0x8, scoped, tag = 'scoped memory for tpu_custom_call.1']
    #allocation5 [shape = 's32[2]{0}', space=sflag, size = 0x8, scoped, tag = 'scoped memory for tpu_custom_call.1']
    #allocation6 [shape = 'u8[262144]{0}', space=vmem, size = 0x40000, scoped, tag = 'input window, operand 1']
    #allocation7 [shape = 's32[2]{0}', space=sflag, size = 0x8, scoped, tag = 'scoped memory for tpu_custom_call.1']
    #allocation8 [shape = 'u8[1024]{0}', space=vmem, size = 0x400, scoped, tag = 'output window, operand 0, single buffered']
    %8 = vsyncpa [#allocation4], 0
    %s9 = scalar_lea.sflag [#allocation4], 1
    %10 = vsyncpa %s9, 0
    %11 = vsyncpa [#allocation7], 0
    %s12 = scalar_lea.sflag [#allocation7], 1
    %13 = vsyncpa %s12, 0
    %14 = vsyncpa [#allocation5], 0
    loop: start=0, step=1, limit=4
    $region2: #{tpu_custom_call.1} parent=1 // loop_pre_header
      _
    $region3: #{tpu_custom_call.1} parent=1 // loop_header
      %s16 = sphi 0, %s20
      %p17 = scmp.ge.s32.totalorder %s16, 4
      %s23 = sphi 0, %s35
      %s24 = sphi 0, %s31
      %s25 = sphi 0, %s23
      %s26 = sphi 0, %s24
      %s27 = sphi 0, %s25
      %s28 = sphi 0, %s26
      %s40 = sphi 0, %s42
      %s43 = sphi 0, %s40
      %s44 = sphi 0, %s43
      %s60 = sphi 0, %s44
      %s66 = sphi 0, %s68
      %s69 = sphi 0, %s66
      %s70 = sphi 0, %s69
      %s86 = sphi 0, %s70
      %s90 = sphi 0, %s90
      %s92 = sphi 0, %s90
      %s93 = sphi 0, %s92
      %s107 = sphi 0, %s93
      %s113 = sphi 0, %s115
      %s116 = sphi 0, %s113
      %s117 = sphi 0, %s116
      %s133 = sphi 0, %s117
    $region4: #{tpu_custom_call.1} parent=1 // loop_header_branch
      %19 = sbr.rel (%p17) target = $region8
    $region5: #{tpu_custom_call.1} parent=1 // loop_body
      %s21 = ssub.s32 %s16, 1
      %s22 = ssub.s32 %s16, 2
      %s29 = sadd.s32 1, %s24
      %p30 = scmp.ge.s32.totalorder %s29, 2
      %s31 = scalar_select %p30, 0, %s29
      %s32 = sadd.s32 1, %s23
      %s33 = scalar_select %p30, %s32, %s23
      %p34 = scmp.ge.s32.totalorder %s33, 1
      %s35 = scalar_select %p34, 0, %s33
      %s36 = ssub.s32 %s23, %s35
      %s37 = ssub.s32 %s24, %s31
      %s38 = sor.u32 %s36, %s37
      %p39 = scmp.eq.s32.totalorder %s38, 0
      %s41 = sadd.s32 %s40, 1
      %s42 = scalar_select %p39, %s40, %s41
      %p45 = pneg %p39
      %p46 = scmp.eq.s32.totalorder %s16, 1
      %p47 = por %p45, %p46
      %p48 = scmp.ne.s32.totalorder %s40, %s43
      %p49 = scmp.eq.s32.totalorder %s16, 0
      %p50 = por %p48, %p49
      %p51 = scmp.ne.s32.totalorder %s40, %s43
      %p52 = scmp.eq.s32.totalorder %s21, 1
      %p53 = por %p51, %p52
      %p54 = scmp.ne.s32.totalorder %s43, %s44
      %p55 = scmp.eq.s32.totalorder %s21, 0
      %p56 = por %p54, %p55
      %p57 = scmp.ne.s32.totalorder %s43, %s44
      %p58 = scmp.eq.s32.totalorder %s22, 1
      %p59 = por %p57, %p58
      %p61 = scmp.ne.s32.totalorder %s44, %s60
      %p62 = scmp.eq.s32.totalorder %s22, 0
      %p63 = por %p61, %p62
      %s64 = ssub.s32 %s24, %s31
      %p65 = scmp.eq.s32.totalorder %s64, 0
      %s67 = sadd.s32 %s66, 1
      %s68 = scalar_select %p65, %s66, %s67
      %p71 = pneg %p65
      %p72 = scmp.eq.s32.totalorder %s16, 1
      %p73 = por %p71, %p72
      %p74 = scmp.ne.s32.totalorder %s66, %s69
      %p75 = scmp.eq.s32.totalorder %s16, 0
      %p76 = por %p74, %p75
      %p77 = scmp.ne.s32.totalorder %s66, %s69
      %p78 = scmp.eq.s32.totalorder %s21, 1
      %p79 = por %p77, %p78
      %p80 = scmp.ne.s32.totalorder %s69, %s70
      %p81 = scmp.eq.s32.totalorder %s21, 0
      %p82 = por %p80, %p81
      %p83 = scmp.ne.s32.totalorder %s69, %s70
      %p84 = scmp.eq.s32.totalorder %s22, 1
      %p85 = por %p83, %p84
      %p87 = scmp.ne.s32.totalorder %s70, %s86
      %p88 = scmp.eq.s32.totalorder %s22, 0
      %p89 = por %p87, %p88
      %s91 = sadd.s32 %s90, 1
      %p94 = scmp.eq.s32.totalorder %s16, 1
      %p95 = scmp.ne.s32.totalorder %s90, %s92
      %p96 = scmp.eq.s32.totalorder %s16, 0
      %p97 = por %p95, %p96
      %p98 = scmp.ne.s32.totalorder %s90, %s92
      %p99 = scmp.eq.s32.totalorder %s21, 1
      %p100 = por %p98, %p99
      %p101 = scmp.ne.s32.totalorder %s92, %s93
      %p102 = scmp.eq.s32.totalorder %s21, 0
      %p103 = por %p101, %p102
      %p104 = scmp.ne.s32.totalorder %s92, %s93
      %p105 = scmp.eq.s32.totalorder %s22, 1
      %p106 = por %p104, %p105
      %p108 = scmp.ne.s32.totalorder %s93, %s107
      %p109 = scmp.eq.s32.totalorder %s22, 0
      %p110 = por %p108, %p109
      %s111 = ssub.s32 %s23, %s35
      %p112 = scmp.eq.s32.totalorder %s111, 0
      %s114 = sadd.s32 %s113, 1
      %s115 = scalar_select %p112, %s113, %s114
      %p118 = pneg %p112
      %p119 = scmp.eq.s32.totalorder %s16, 1
      %p120 = por %p118, %p119
      %p121 = scmp.ne.s32.totalorder %s113, %s116
      %p122 = scmp.eq.s32.totalorder %s16, 0
      %p123 = por %p121, %p122
      %p124 = scmp.ne.s32.totalorder %s113, %s116
      %p125 = scmp.eq.s32.totalorder %s21, 1
      %p126 = por %p124, %p125
      %p127 = scmp.ne.s32.totalorder %s116, %s117
      %p128 = scmp.eq.s32.totalorder %s21, 0
      %p129 = por %p127, %p128
      %p130 = scmp.ne.s32.totalorder %s116, %s117
      %p131 = scmp.eq.s32.totalorder %s22, 1
      %p132 = por %p130, %p131
      %p134 = scmp.ne.s32.totalorder %s117, %s133
      %p135 = scmp.eq.s32.totalorder %s22, 0
      %p136 = por %p134, %p135
      %p137 = scmp.le.s32.totalorder 1, %s16
      %p138 = scmp.lt.s32.totalorder %s16, 3
      %p139 = pnand %p137, %p138
      %p140 = pneg %p139
      // Predicated region
      $region9: #{tpu_custom_call.1} parent=5 // pred_check
        _
      $region10: #{tpu_custom_call.1} parent=5 // pred_check_branch
        %142 = sbr.rel (%p139) target = $region12
      $region11: #{tpu_custom_call.1} parent=5 // pred_region
        %s143 = ssub.s32 %s16, 1
        // Predicated region
        $region13: #{tpu_custom_call.1} parent=11 // pred_check
          %p144 = pneg %p103
        $region14: #{tpu_custom_call.1} parent=11 // pred_check_branch
          %146 = sbr.rel (%p144) target = $region16
        $region15: #{tpu_custom_call.1} parent=11 // pred_region
          _
        $region16: #{tpu_custom_call.1} parent=11 // pred_fallthru
          _
      $region12: #{tpu_custom_call.1} parent=5 // pred_fallthru
        _
      %p147 = scmp.lt.s32.totalorder %s16, 2
      // Predicated region
      $region17: #{tpu_custom_call.1} parent=5 // pred_check
        %p148 = pneg %p147
      $region18: #{tpu_custom_call.1} parent=5 // pred_check_branch
        %150 = sbr.rel (%p148) target = $region20
      $region19: #{tpu_custom_call.1} parent=5 // pred_region
        // Predicated region
        $region21: #{tpu_custom_call.1} parent=19 // pred_check
          %p151 = pneg %p50
        $region22: #{tpu_custom_call.1} parent=19 // pred_check_branch
          %153 = sbr.rel (%p151) target = $region24
        $region23: #{tpu_custom_call.1} parent=19 // pred_region
          %s154 = sand.u32 %s40, 1
          %s155 = scalar_lea.sflag [#allocation4], %s154
          %s156 = sand.u32 %s40, 1
          %s157 = smul.addr %s156, 4
          %s158 = scalar_lea.vmem [#allocation3], %s157
          %s159 = smul.u32 4, %s24
          %s161 = ssub.s32 64, 64
          %162 = vsyncadd %s155, %s161
          %s163 = smul.addr %s23, 8
          %s164 = sadd.s32 %s159, %s163
          %s165 = smul.addr %s164, 16
          %s166 = scalar_lea.hbm %s0, %s165
          %s168 = sshll.u32 %s158, 4
          %s169 = int_to_ptr.vmem [resolvable:$true] %s168
          %171 = dma.hbm_to_vmem [thread:$0]  %s166, 64, %s169, %s155
        $region24: #{tpu_custom_call.1} parent=19 // pred_fallthru
          _
        // Predicated region
        $region25: #{tpu_custom_call.1} parent=19 // pred_check
          %p172 = pneg %p76
        $region26: #{tpu_custom_call.1} parent=19 // pred_check_branch
          %174 = sbr.rel (%p172) target = $region28
        $region27: #{tpu_custom_call.1} parent=19 // pred_region
          %s175 = sand.u32 %s66, 1
          %s176 = scalar_lea.sflag [#allocation7], %s175
          %s177 = sand.u32 %s66, 1
          %s178 = smul.addr %s177, 256
          %s179 = scalar_lea.vmem [#allocation6], %s178
          %s180 = smul.u32 64, %s24
          %s182 = ssub.s32 4096, 4096
          %183 = vsyncadd %s176, %s182
          %s184 = smul.addr %s180, 64
          %s185 = scalar_lea.hbm %s1, %s184
          %s186 = sshll.u32 %s179, 4
          %s187 = int_to_ptr.vmem [resolvable:$true] %s186
          %192 = dma.hbm_to_vmem [thread:$0]  %s185, 4096, %s187, %s176, 64, 64, 4
        $region28: #{tpu_custom_call.1} parent=19 // pred_fallthru
          _
      $region20: #{tpu_custom_call.1} parent=5 // pred_fallthru
        _
      %p193 = scmp.le.s32.totalorder 1, %s16
      %p194 = scmp.lt.s32.totalorder %s16, 3
      %p195 = pnand %p193, %p194
      %p196 = pneg %p195
      // Predicated region
      $region29: #{tpu_custom_call.1} parent=5 // pred_check
        _
      $region30: #{tpu_custom_call.1} parent=5 // pred_check_branch
        %198 = sbr.rel (%p195) target = $region32
      $region31: #{tpu_custom_call.1} parent=5 // pred_region
        %s199 = ssub.s32 %s16, 1
        %s200 = sand.u32 %s43, 1
        %s201 = scalar_lea.sflag [#allocation4], %s200
        %s202 = sand.u32 %s43, 1
        %s203 = smul.addr %s202, 4
        %s204 = scalar_lea.vmem [#allocation3], %s203
        // Predicated region
        $region33: #{tpu_custom_call.1} parent=31 // pred_check
          %p205 = pneg %p56
        $region34: #{tpu_custom_call.1} parent=31 // pred_check_branch
          %207 = sbr.rel (%p205) target = $region36
        $region35: #{tpu_custom_call.1} parent=31 // pred_region
          %208 = dma.done %s201, 64
        $region36: #{tpu_custom_call.1} parent=31 // pred_fallthru
          _
        %s209 = sand.u32 %s69, 1
        %s210 = scalar_lea.sflag [#allocation7], %s209
        %s211 = sand.u32 %s69, 1
        %s212 = smul.addr %s211, 256
        %s213 = scalar_lea.vmem [#allocation6], %s212
        // Predicated region
        $region37: #{tpu_custom_call.1} parent=31 // pred_check
          %p214 = pneg %p82
        $region38: #{tpu_custom_call.1} parent=31 // pred_check_branch
          %216 = sbr.rel (%p214) target = $region40
        $region39: #{tpu_custom_call.1} parent=31 // pred_region
          %217 = dma.done %s210, 4096
        $region40: #{tpu_custom_call.1} parent=31 // pred_fallthru
          _
        %s218 = sand.u32 %s43, 1
        %s219 = scalar_lea.sflag [#allocation4], %s218
        %s220 = sand.u32 %s43, 1
        %s221 = smul.addr %s220, 4
        %s222 = scalar_lea.vmem [#allocation3], %s221
        %p223 = pneg %p56
        %p224 = pneg %p53
        %s225 = sand.u32 %s69, 1
        %s226 = scalar_lea.sflag [#allocation7], %s225
        %s227 = sand.u32 %s69, 1
        %s228 = smul.addr %s227, 256
        %s229 = scalar_lea.vmem [#allocation6], %s228
        %p230 = pneg %p82
        %p231 = pneg %p79
        %p232 = pneg %p103
        %p233 = pneg %p100
        %p234 = pneg %p129
        %p235 = pneg %p126
        %s236 = smul.u32 4, %s26
        %s237 = smul.u32 64, %s26
        %p239 = scmp.eq.s32.totalorder %s26, 0
        // Predicated region
        $region41: #{tpu_custom_call.1} parent=31 // pred_check
          %p240 = pneg %p239
        $region42: #{tpu_custom_call.1} parent=31 // pred_check_branch
          %242 = sbr.rel (%p240) target = $region44
        $region43: #{tpu_custom_call.1} parent=31 // pred_region
          %243 = vst [vmem:[#allocation2] sm:$0x3] 0.0
        $region44: #{tpu_custom_call.1} parent=31 // pred_fallthru
          _
        %v244 = vld [vmem:[%s213] sm:$0xf]
        %v245 = vld [vmem:[%s213 + $0x4] sm:$0xf]
        %v246 = vld [vmem:[%s213 + $0x8] sm:$0xf]
        %v247 = vld [vmem:[%s213 + $0xc] sm:$0xf]
        %v248 = vld [vmem:[%s213 + $0x10] sm:$0xf]
        %v249 = vld [vmem:[%s213 + $0x14] sm:$0xf]
        %v250 = vld [vmem:[%s213 + $0x18] sm:$0xf]
        %v251 = vld [vmem:[%s213 + $0x1c] sm:$0xf]
        %v252 = vld [vmem:[%s213 + $0x20] sm:$0xf]
        %v253 = vld [vmem:[%s213 + $0x24] sm:$0xf]
        %v254 = vld [vmem:[%s213 + $0x28] sm:$0xf]
        %v255 = vld [vmem:[%s213 + $0x2c] sm:$0xf]
        %v256 = vld [vmem:[%s213 + $0x30] sm:$0xf]
        %v257 = vld [vmem:[%s213 + $0x34] sm:$0xf]
        %v258 = vld [vmem:[%s213 + $0x38] sm:$0xf]
        %v259 = vld [vmem:[%s213 + $0x3c] sm:$0xf]
        %v260 = vld [vmem:[%s213 + $0x40] sm:$0xf]
        %v261 = vld [vmem:[%s213 + $0x44] sm:$0xf]
        %v262 = vld [vmem:[%s213 + $0x48] sm:$0xf]
        %v263 = vld [vmem:[%s213 + $0x4c] sm:$0xf]
        %v264 = vld [vmem:[%s213 + $0x50] sm:$0xf]
        %v265 = vld [vmem:[%s213 + $0x54] sm:$0xf]
        %v266 = vld [vmem:[%s213 + $0x58] sm:$0xf]
        %v267 = vld [vmem:[%s213 + $0x5c] sm:$0xf]
        %v268 = vld [vmem:[%s213 + $0x60] sm:$0xf]
        %v269 = vld [vmem:[%s213 + $0x64] sm:$0xf]
        %v270 = vld [vmem:[%s213 + $0x68] sm:$0xf]
        %v271 = vld [vmem:[%s213 + $0x6c] sm:$0xf]
        %v272 = vld [vmem:[%s213 + $0x70] sm:$0xf]
        %v273 = vld [vmem:[%s213 + $0x74] sm:$0xf]
        %v274 = vld [vmem:[%s213 + $0x78] sm:$0xf]
        %v275 = vld [vmem:[%s213 + $0x7c] sm:$0xf]
        %v276 = vld [vmem:[%s213 + $0x80] sm:$0xf]
        %v277 = vld [vmem:[%s213 + $0x84] sm:$0xf]
        %v278 = vld [vmem:[%s213 + $0x88] sm:$0xf]
        %v279 = vld [vmem:[%s213 + $0x8c] sm:$0xf]
        %v280 = vld [vmem:[%s213 + $0x90] sm:$0xf]
        %v281 = vld [vmem:[%s213 + $0x94] sm:$0xf]
        %v282 = vld [vmem:[%s213 + $0x98] sm:$0xf]
        %v283 = vld [vmem:[%s213 + $0x9c] sm:$0xf]
        %v284 = vld [vmem:[%s213 + $0xa0] sm:$0xf]
        %v285 = vld [vmem:[%s213 + $0xa4] sm:$0xf]
        %v286 = vld [vmem:[%s213 + $0xa8] sm:$0xf]
        %v287 = vld [vmem:[%s213 + $0xac] sm:$0xf]
        %v288 = vld [vmem:[%s213 + $0xb0] sm:$0xf]
        %v289 = vld [vmem:[%s213 + $0xb4] sm:$0xf]
        %v290 = vld [vmem:[%s213 + $0xb8] sm:$0xf]
        %v291 = vld [vmem:[%s213 + $0xbc] sm:$0xf]
        %v292 = vld [vmem:[%s213 + $0xc0] sm:$0xf]
        %v293 = vld [vmem:[%s213 + $0xc4] sm:$0xf]
        %v294 = vld [vmem:[%s213 + $0xc8] sm:$0xf]
        %v295 = vld [vmem:[%s213 + $0xcc] sm:$0xf]
        %v296 = vld [vmem:[%s213 + $0xd0] sm:$0xf]
        %v297 = vld [vmem:[%s213 + $0xd4] sm:$0xf]
        %v298 = vld [vmem:[%s213 + $0xd8] sm:$0xf]
        %v299 = vld [vmem:[%s213 + $0xdc] sm:$0xf]
        %v300 = vld [vmem:[%s213 + $0xe0] sm:$0xf]
        %v301 = vld [vmem:[%s213 + $0xe4] sm:$0xf]
        %v302 = vld [vmem:[%s213 + $0xe8] sm:$0xf]
        %v303 = vld [vmem:[%s213 + $0xec] sm:$0xf]
        %v304 = vld [vmem:[%s213 + $0xf0] sm:$0xf]
        %v305 = vld [vmem:[%s213 + $0xf4] sm:$0xf]
        %v306 = vld [vmem:[%s213 + $0xf8] sm:$0xf]
        %v307 = vld [vmem:[%s213 + $0xfc] sm:$0xf]
        %v308 = vld [vmem:[%s204] sm:$0xf]
        %v309 = vld [vmem:[#allocation2] sm:$0x3]
        %v312 = vunpack.c.l.s4 1966171168
        %v313 = vunpack.c.0.s8 %v312
        %v314 = vlaneseq
        %v315 = vshrl.u32 %v314, 7
        %v316 = vsub.s32 %v313, %v315
        %v317 = vrot.slane %v308, %v316
        %v318 = vcombine.high %v317, %v317
        %v320 = vunpack.c.l.s4 1966171168
        %v321 = vunpack.c.0.s8 %v320
        %v322 = vlaneseq
        %v323 = vshrl.u32 %v322, 7
        %v324 = vsub.s32 %v321, %v323
        %v325 = vrot.slane %v317, %v324
        %v327 = vunpack.c.l.s4 1966171168
        %v328 = vunpack.c.0.s8 %v327
        %v329 = vlaneseq
        %v330 = vshrl.u32 %v329, 7
        %v331 = vsub.s32 %v328, %v330
        %v332 = vrot.slane %v318, %v331
        %v333 = vcombine.high %v325, %v325
        %v334 = vcombine.high %v332, %v332
        %v403 = vunpack.c.l.b16 %v244
        %v404 = vunpack.c.l.b16 %v245
        %v405 = vunpack.c.l.b16 %v246
        %v406 = vunpack.c.l.b16 %v247
        %v407 = vunpack.c.l.b16 %v248
        %v408 = vunpack.c.l.b16 %v249
        %v409 = vunpack.c.l.b16 %v250
        %v410 = vunpack.c.l.b16 %v251
        %v411 = vunpack.c.l.b16 %v252
        %v412 = vunpack.c.l.b16 %v253
        %v413 = vunpack.c.l.b16 %v254
        %v414 = vunpack.c.l.b16 %v255
        %v415 = vunpack.c.l.b16 %v256
        %v416 = vunpack.c.l.b16 %v257
        %v417 = vunpack.c.l.b16 %v258
        %v418 = vunpack.c.l.b16 %v259
        %v419 = vunpack.c.l.b16 %v260
        %v420 = vunpack.c.l.b16 %v261
        %v421 = vunpack.c.l.b16 %v262
        %v422 = vunpack.c.l.b16 %v263
        %v423 = vunpack.c.l.b16 %v264
        %v424 = vunpack.c.l.b16 %v265
        %v425 = vunpack.c.l.b16 %v266
        %v426 = vunpack.c.l.b16 %v267
        %v427 = vunpack.c.l.b16 %v268
        %v428 = vunpack.c.l.b16 %v269
        %v429 = vunpack.c.l.b16 %v270
        %v430 = vunpack.c.l.b16 %v271
        %v431 = vunpack.c.l.b16 %v272
        %v432 = vunpack.c.l.b16 %v273
        %v433 = vunpack.c.l.b16 %v274
        %v434 = vunpack.c.l.b16 %v275
        %v435 = vunpack.c.l.b16 %v276
        %v436 = vunpack.c.l.b16 %v277
        %v437 = vunpack.c.l.b16 %v278
        %v438 = vunpack.c.l.b16 %v279
        %v439 = vunpack.c.l.b16 %v280
        %v440 = vunpack.c.l.b16 %v281
        %v441 = vunpack.c.l.b16 %v282
        %v442 = vunpack.c.l.b16 %v283
        %v443 = vunpack.c.l.b16 %v284
        %v444 = vunpack.c.l.b16 %v285
        %v445 = vunpack.c.l.b16 %v286
        %v446 = vunpack.c.l.b16 %v287
        %v447 = vunpack.c.l.b16 %v288
        %v448 = vunpack.c.l.b16 %v289
        %v449 = vunpack.c.l.b16 %v290
        %v450 = vunpack.c.l.b16 %v291
        %v451 = vunpack.c.l.b16 %v292
        %v452 = vunpack.c.l.b16 %v293
        %v453 = vunpack.c.l.b16 %v294
        %v454 = vunpack.c.l.b16 %v295
        %v455 = vunpack.c.l.b16 %v296
        %v456 = vunpack.c.l.b16 %v297
        %v457 = vunpack.c.l.b16 %v298
        %v458 = vunpack.c.l.b16 %v299
        %v459 = vunpack.c.l.b16 %v300
        %v460 = vunpack.c.l.b16 %v301
        %v461 = vunpack.c.l.b16 %v302
        %v462 = vunpack.c.l.b16 %v303
        %v463 = vunpack.c.l.b16 %v304
        %v464 = vunpack.c.l.b16 %v305
        %v465 = vunpack.c.l.b16 %v306
        %v466 = vunpack.c.l.b16 %v307
        %v467 = vpack.c.b16 %v404, %v403
        %v468 = vpack.c.b16 %v406, %v405
        %v469 = vpack.c.b16 %v408, %v407
        %v470 = vpack.c.b16 %v410, %v409
        %v471 = vpack.c.b16 %v412, %v411
        %v472 = vpack.c.b16 %v414, %v413
        %v473 = vpack.c.b16 %v416, %v415
        %v474 = vpack.c.b16 %v418, %v417
        %v475 = vpack.c.b16 %v420, %v419
        %v476 = vpack.c.b16 %v422, %v421
        %v477 = vpack.c.b16 %v424, %v423
        %v478 = vpack.c.b16 %v426, %v425
        %v479 = vpack.c.b16 %v428, %v427
        %v480 = vpack.c.b16 %v430, %v429
        %v481 = vpack.c.b16 %v432, %v431
        %v482 = vpack.c.b16 %v434, %v433
        %v483 = vpack.c.b16 %v436, %v435
        %v484 = vpack.c.b16 %v438, %v437
        %v485 = vpack.c.b16 %v440, %v439
        %v486 = vpack.c.b16 %v442, %v441
        %v487 = vpack.c.b16 %v444, %v443
        %v488 = vpack.c.b16 %v446, %v445
        %v489 = vpack.c.b16 %v448, %v447
        %v490 = vpack.c.b16 %v450, %v449
        %v491 = vpack.c.b16 %v452, %v451
        %v492 = vpack.c.b16 %v454, %v453
        %v493 = vpack.c.b16 %v456, %v455
        %v494 = vpack.c.b16 %v458, %v457
        %v495 = vpack.c.b16 %v460, %v459
        %v496 = vpack.c.b16 %v462, %v461
        %v497 = vpack.c.b16 %v464, %v463
        %v498 = vpack.c.b16 %v466, %v465
        %531 = vmatprep.subr.bf16.mxu0 0
        %532 = vmatpush1.bf16.msra.mxu0 %v474
        %533 = vmatprep.subr.bf16.mxu0 0
        %534 = vmatpush1.bf16.msra.mxu0 %v473
        %535 = vmatprep.subr.bf16.mxu0 0
        %536 = vmatpush1.bf16.msra.mxu0 %v472
        %537 = vmatprep.subr.bf16.mxu0 0
        %538 = vmatpush1.bf16.msra.mxu0 %v471
        %539 = vmatprep.subr.bf16.mxu0 0
        %540 = vmatpush1.bf16.msra.mxu0 %v470
        %541 = vmatprep.subr.bf16.mxu0 0
        %542 = vmatpush1.bf16.msra.mxu0 %v469
        %543 = vmatprep.subr.bf16.mxu0 0
        %544 = vmatpush1.bf16.msra.mxu0 %v468
        %545 = vmatprep.subr.bf16.mxu0 0
        %546 = vmatpush1.bf16.msra.mxu0 %v467
        %547 = vmatprep.subr.bf16.mxu0 0
        %548 = vmatpush2.bf16.msra.mxu0 %v482
        %549 = vmatprep.subr.bf16.mxu0 0
        %550 = vmatpush2.bf16.msra.mxu0 %v481
        %551 = vmatprep.subr.bf16.mxu0 0
        %552 = vmatpush2.bf16.msra.mxu0 %v480
        %553 = vmatprep.subr.bf16.mxu0 0
        %554 = vmatpush2.bf16.msra.mxu0 %v479
        %555 = vmatprep.subr.bf16.mxu0 0
        %556 = vmatpush2.bf16.msra.mxu0 %v478
        %557 = vmatprep.subr.bf16.mxu0 0
        %558 = vmatpush2.bf16.msra.mxu0 %v477
        %559 = vmatprep.subr.bf16.mxu0 0
        %560 = vmatpush2.bf16.msra.mxu0 %v476
        %561 = vmatprep.subr.bf16.mxu0 0
        %562 = vmatpush2.bf16.msra.mxu0 %v475
        %563 = vmatprep.mubr.bf16.mxu0 %v332
        %564 = vmatmul.mubr.bf16.gmra.mxu0 %v325
        %v565 = vpop.f32.mrf.mxu0
        %v566 = vadd.f32 0.0, %v565
        %v567 = vpop.f32.mrf.mxu0
        %v568 = vpop.f32.mrf.mxu0
        %v569 = vpop.f32.mrf.mxu0
        %570 = vdwg.mxu0
        %571 = vmatprep.subr.bf16.mxu0 0
        %572 = vmatpush1.bf16.msra.mxu0 %v490
        %573 = vmatprep.subr.bf16.mxu0 0
        %574 = vmatpush1.bf16.msra.mxu0 %v489
        %575 = vmatprep.subr.bf16.mxu0 0
        %576 = vmatpush1.bf16.msra.mxu0 %v488
        %577 = vmatprep.subr.bf16.mxu0 0
        %578 = vmatpush1.bf16.msra.mxu0 %v487
        %579 = vmatprep.subr.bf16.mxu0 0
        %580 = vmatpush1.bf16.msra.mxu0 %v486
        %581 = vmatprep.subr.bf16.mxu0 0
        %582 = vmatpush1.bf16.msra.mxu0 %v485
        %583 = vmatprep.subr.bf16.mxu0 0
        %584 = vmatpush1.bf16.msra.mxu0 %v484
        %585 = vmatprep.subr.bf16.mxu0 0
        %586 = vmatpush1.bf16.msra.mxu0 %v483
        %587 = vmatprep.subr.bf16.mxu0 0
        %588 = vmatpush2.bf16.msra.mxu0 %v498
        %589 = vmatprep.subr.bf16.mxu0 0
        %590 = vmatpush2.bf16.msra.mxu0 %v497
        %591 = vmatprep.subr.bf16.mxu0 0
        %592 = vmatpush2.bf16.msra.mxu0 %v496
        %593 = vmatprep.subr.bf16.mxu0 0
        %594 = vmatpush2.bf16.msra.mxu0 %v495
        %595 = vmatprep.subr.bf16.mxu0 0
        %596 = vmatpush2.bf16.msra.mxu0 %v494
        %597 = vmatprep.subr.bf16.mxu0 0
        %598 = vmatpush2.bf16.msra.mxu0 %v493
        %599 = vmatprep.subr.bf16.mxu0 0
        %600 = vmatpush2.bf16.msra.mxu0 %v492
        %601 = vmatprep.subr.bf16.mxu0 0
        %602 = vmatpush2.bf16.msra.mxu0 %v491
        %603 = vmatprep.mubr.bf16.mxu0 %v334
        %604 = vmatmul.mubr.bf16.gmra.mxu0 %v333
        %v605 = vpop.f32.mrf.mxu0
        %v606 = vadd.f32 %v566, %v605
        %v607 = vpop.f32.mrf.mxu0
        %v608 = vpop.f32.mrf.mxu0
        %v609 = vpop.f32.mrf.mxu0
        %610 = vdwg.mxu0
        %v611 = vadd.f32 %v309, %v606
        %612 = vst [vmem:[#allocation2] sm:$0x3] %v611
        %p613 = scmp.eq.s32.totalorder %s26, 1
        // Predicated region
        $region45: #{tpu_custom_call.1} parent=31 // pred_check
          %p614 = pneg %p613
        $region46: #{tpu_custom_call.1} parent=31 // pred_check_branch
          %616 = sbr.rel (%p614) target = $region48
        $region47: #{tpu_custom_call.1} parent=31 // pred_region
          %v617 = vld [vmem:[#allocation2] sm:$0x3]
          %v618 = vld [vmem:[%s2] sm:$0x1]
          %v620 = vlaneseq
          %v621 = vshrl.u32 %v620, 7
          %v622 = vsub.s32 0, %v621
          %v623 = vrot.slane %v618, %v622
          %v625 = vadd.f32 %v617, %v623
          %v626 = vlaneseq
          %v627 = vand.u32 %v626, 127
          %vm628 = vcmp.ge.s32.totalorder %v627, 0
          %vm629 = vcmp.lt.s32.totalorder %v627, 10
          %vm630 = vmand %vm628, %vm629
          %v631 = vsel %vm630, %v625, -1e+30
          %vm632 = vcmask 1041408
          %v633 = vsel %vm632, %v631, -inf
          %634 = vmax.xlane.f32.xlu0 %v633
          %v635 = vpop.xlane.xlu0 %634
          %v636 = vsub.f32 %v631, %v635
          %v637 = vmul.f32 %v636, 1.442695
          %v638 = vpow.pop %v637
          %v639 = vsel %vm632, %v638, 0.0
          %640 = vadd.xlane.f32.xlu0 %v639
          %v641 = vpop.xlane.xlu0 %640
          %v642 = vrcp.pop %v641
          %v643 = vmul.f32 1.0, %v642
          %v644 = vmul.f32 %v638, %v643
          %v645 = vadd.f32 %v644, 0.0
          %vm646 = vcmp.ge.s32.totalorder %v627, 10
          %vm647 = vcmp.lt.s32.totalorder %v627, 20
          %vm648 = vmand %vm646, %vm647
          %v649 = vsel %vm648, %v625, -1e+30
          %v650 = vsel %vm632, %v649, -inf
          %651 = vmax.xlane.f32.xlu0 %v650
          %v652 = vpop.xlane.xlu0 %651
          %v653 = vsub.f32 %v649, %v652
          %v654 = vmul.f32 %v653, 1.442695
          %v655 = vpow.pop %v654
          %v656 = vsel %vm632, %v655, 0.0
          %657 = vadd.xlane.f32.xlu0 %v656
          %v658 = vpop.xlane.xlu0 %657
          %v659 = vrcp.pop %v658
          %v660 = vmul.f32 1.0, %v659
          %v661 = vmul.f32 %v655, %v660
          %v662 = vadd.f32 %v645, %v661
          %vm663 = vcmp.ge.s32.totalorder %v627, 20
          %vm664 = vcmp.lt.s32.totalorder %v627, 30
          %vm665 = vmand %vm663, %vm664
          %v666 = vsel %vm665, %v625, -1e+30
          %v667 = vsel %vm632, %v666, -inf
          %668 = vmax.xlane.f32.xlu0 %v667
          %v669 = vpop.xlane.xlu0 %668
          %v670 = vsub.f32 %v666, %v669
          %v671 = vmul.f32 %v670, 1.442695
          %v672 = vpow.pop %v671
          %v673 = vsel %vm632, %v672, 0.0
          %674 = vadd.xlane.f32.xlu0 %v673
          %v675 = vpop.xlane.xlu0 %674
          %v676 = vrcp.pop %v675
          %v677 = vmul.f32 1.0, %v676
          %v678 = vmul.f32 %v672, %v677
          %v679 = vadd.f32 %v662, %v678
          %680 = vst [vmem:[#allocation8] sm:$0x3] %v679
        $region48: #{tpu_custom_call.1} parent=31 // pred_fallthru
          _
        // Predicated region
        $region49: #{tpu_custom_call.1} parent=31 // pred_check
          %p681 = pneg %p126
        $region50: #{tpu_custom_call.1} parent=31 // pred_check_branch
          %683 = sbr.rel (%p681) target = $region52
        $region51: #{tpu_custom_call.1} parent=31 // pred_region
          %s685 = ssub.s32 32, 32
          %686 = vsyncadd [#allocation5], %s685
          %s687 = smul.addr %s25, 32
          %s688 = scalar_lea.hbm %s3, %s687
          %s690 = sshll.u32 [#allocation8], 4
          %s691 = int_to_ptr.vmem [resolvable:$true] %s690
          %693 = dma.vmem_to_hbm [thread:$0]  %s691, 32, %s688, [#allocation5]
        $region52: #{tpu_custom_call.1} parent=31 // pred_fallthru
          _
        // Predicated region
        $region53: #{tpu_custom_call.1} parent=31 // pred_check
          %p694 = pneg %p126
        $region54: #{tpu_custom_call.1} parent=31 // pred_check_branch
          %696 = sbr.rel (%p694) target = $region56
        $region55: #{tpu_custom_call.1} parent=31 // pred_region
          %697 = dma.done [#allocation5], 32
        $region56: #{tpu_custom_call.1} parent=31 // pred_fallthru
          _
      $region32: #{tpu_custom_call.1} parent=5 // pred_fallthru
        _
      %p698 = scmp.le.s32.totalorder 2, %s16
      // Predicated region
      $region57: #{tpu_custom_call.1} parent=5 // pred_check
        %p699 = pneg %p698
      $region58: #{tpu_custom_call.1} parent=5 // pred_check_branch
        %701 = sbr.rel (%p699) target = $region60
      $region59: #{tpu_custom_call.1} parent=5 // pred_region
        %s702 = ssub.s32 %s16, 2
      $region60: #{tpu_custom_call.1} parent=5 // pred_fallthru
        _
    $region6: #{tpu_custom_call.1} parent=1 // loop_footer
      %s20 = sadd.s32 1, %s16
    $region7: #{tpu_custom_call.1} parent=1 // loop_footer_branch
      %15 = sbr.rel target = $region3
    $region8: #{tpu_custom_call.1} parent=1 // loop_exit
      _
    %703 = vsyncpa [#allocation4], 1
    %s704 = scalar_lea.sflag [#allocation4], 1
    %705 = vsyncpa %s704, 1
    %706 = vsyncpa [#allocation7], 1
    %s707 = scalar_lea.sflag [#allocation7], 1
    %708 = vsyncpa %s707, 1
    %709 = vsyncpa [#allocation5], 1
    %s710 = scalar_lea.sflag [#allocation5], 1
    %711 = vsyncpa %s710, 1

</llo_original>
